<compile_context>
chip_gen: v6e
topology: v6e:2x2x1
jax: 0.10.0
libtpu: 0.0.40
codegen_flags: <defaults>
</compile_context>

<pallas_src>
import jax
import jax.numpy as jnp
from jax.experimental import pallas as pl
from jax.experimental.pallas import tpu as pltpu

IN_F = 5
HID_F = 8
OUT_F = 3

LANE = 128      # lane width: only the hidden dim is padded to this
SUB = 8         # sublane width: batch tile rounded to a multiple of this
TB_MAX = 4096   # batch-tile cap (amortizes per-grid-step overhead)

Hp = ((HID_F + LANE - 1) // LANE) * LANE   # 128 — lane-aligned hidden dim


def _round_up(n, m):
    return ((n + m - 1) // m) * m


def _mlp_kernel(x_ref, w1_ref, b1_ref, w2_ref, b2_ref, o_ref):
    # fc1: (tb, 5) @ (5, 128) + (1, 128) -> ReLU   (hidden zero-padded 8 -> 128)
    h = jnp.dot(x_ref[...], w1_ref[...], preferred_element_type=jnp.float32)
    h = jnp.maximum(h + b1_ref[...], 0.0)
    # fc2: (tb, 128) @ (128, 3) + (1, 3)           (padded hidden rows are zero)
    y = jnp.dot(h, w2_ref[...], preferred_element_type=jnp.float32)
    o_ref[...] = (y + b2_ref[...]).astype(o_ref.dtype)


def pad_params(w1, b1, w2, b2):
    """Pad ONLY the hidden dim (8 -> 128), once. In/out feature dims unpadded."""
    w1p = jnp.zeros((IN_F, Hp), jnp.float32).at[:, :HID_F].set(w1)
    b1p = jnp.zeros((1, Hp), jnp.float32).at[0, :HID_F].set(b1)
    w2p = jnp.zeros((Hp, OUT_F), jnp.float32).at[:HID_F, :].set(w2)
    b2p = b2.reshape(1, OUT_F).astype(jnp.float32)
    return w1p, b1p, w2p, b2p


@jax.jit
def simple_net_forward(x, w1p, b1p, w2p, b2p):
    """x: (B, 5) float32. w1p/b1p/w2p/b2p: pre-padded params from pad_params()."""
    B = x.shape[0]
    # Tile the batch so the grid divides evenly AND padding waste is < one tile.
    n_tiles = pl.cdiv(max(B, 1), TB_MAX)
    tb = _round_up(pl.cdiv(max(B, 1), n_tiles), SUB)   # static (shape-derived)
    Bp = _round_up(B, tb)

    xp = x.astype(jnp.float32)
    if Bp != B:
        # Batch-only padding; padded rows are sliced off at the end.
        xp = jnp.pad(xp, ((0, Bp - B), (0, 0)))

    # Advisory cost for XLA scheduling — real (unpadded) work.
    flops = 2 * Bp * (IN_F * HID_F + HID_F * OUT_F)
    bytes_accessed = 4 * (
        Bp * IN_F + IN_F * Hp + Hp + Hp * OUT_F + OUT_F + Bp * OUT_F
    )

    out_p = pl.pallas_call(
        _mlp_kernel,
        out_shape=jax.ShapeDtypeStruct((Bp, OUT_F), jnp.float32),
        grid=(Bp // tb,),
        in_specs=[
            # (tb, 5): last block dim == full array dim, so no 128-lane padding.
            pl.BlockSpec((tb, IN_F), lambda i: (i, 0)),
            # Weights / biases: same block every step -> stay VMEM-resident.
            pl.BlockSpec((IN_F, Hp), lambda i: (0, 0)),
            pl.BlockSpec((1, Hp), lambda i: (0, 0)),
            pl.BlockSpec((Hp, OUT_F), lambda i: (0, 0)),
            pl.BlockSpec((1, OUT_F), lambda i: (0, 0)),
        ],
        out_specs=pl.BlockSpec((tb, OUT_F), lambda i: (i, 0)),
        compiler_params=pltpu.CompilerParams(
            dimension_semantics=("parallel",),
        ),
        cost_estimate=pl.CostEstimate(
            flops=flops, transcendentals=0, bytes_accessed=bytes_accessed,
        ),
    )(xp, w1p, b1p, w2p, b2p)

    return out_p[:B]


def init_params(key):
    """Deterministic init mimicking nn.Linear defaults: U(-1/sqrt(fan_in), +)."""
    k1, k2, k3, k4 = jax.random.split(key, 4)
    bound1 = 1.0 / jnp.sqrt(float(IN_F))
    bound2 = 1.0 / jnp.sqrt(float(HID_F))
    # Stored as (in_features, out_features) so forward is x @ W + b
    # (== PyTorch x @ W_t.T + b with W = W_t.T).
    w1 = jax.random.uniform(k1, (IN_F, HID_F), jnp.float32, -bound1, bound1)
    b1 = jax.random.uniform(k2, (HID_F,), jnp.float32, -bound1, bound1)
    w2 = jax.random.uniform(k3, (HID_F, OUT_F), jnp.float32, -bound2, bound2)
    b2 = jax.random.uniform(k4, (OUT_F,), jnp.float32, -bound2, bound2)
    return w1, b1, w2, b2


# TODO(synk): SimpleNet.mutate() is a host-side parameter update (param += noise),
# not part of the forward pass; it has no kernel equivalent and is omitted.

if __name__ == "__main__":
    key = jax.random.PRNGKey(0)
    k_param, k_x1, k_x2, k_x3 = jax.random.split(key, 4)

    w1, b1, w2, b2 = init_params(k_param)
    params_p = pad_params(w1, b1, w2, b2)   # padding hoisted out of the forward

    def ref_fn(x):
        return jnp.maximum(x @ w1 + b1, 0.0) @ w2 + b2

    # Small Pong-style batch of 5-dim state vectors.
    x_small = jax.random.normal(k_x1, (4, IN_F), jnp.float32)
    out_small = jax.block_until_ready(simple_net_forward(x_small, *params_p))
    assert out_small.shape == (4, OUT_F)
    assert jnp.allclose(out_small, ref_fn(x_small), atol=1e-5, rtol=1e-5)

    # Batch not a multiple of 8: exercises batch padding + the final [:B] slice.
    x_big = jax.random.normal(k_x2, (300, IN_F), jnp.float32)
    out_big = jax.block_until_ready(simple_net_forward(x_big, *params_p))
    assert out_big.shape == (300, OUT_F)
    assert jnp.allclose(out_big, ref_fn(x_big), atol=1e-4, rtol=1e-4)

    # Batch larger than TB_MAX: exercises the multi-step grid with
    # VMEM-resident weights across steps.
    x_multi = jax.random.normal(k_x3, (5000, IN_F), jnp.float32)
    out_multi = jax.block_until_ready(simple_net_forward(x_multi, *params_p))
    assert out_multi.shape == (5000, OUT_F)
    assert jnp.allclose(out_multi, ref_fn(x_multi), atol=1e-4, rtol=1e-4)

    print("KERNEL_OK")
</pallas_src>

<mosaic_0001>
module attributes {stable_mosaic.version = 11 : i64} {
  func.func @_mlp_kernel(%arg0: i32, %arg1: memref<8x5xf32, #tpu.memory_space<vmem>>, %arg2: memref<5x128xf32, #tpu.memory_space<vmem>>, %arg3: memref<1x128xf32, #tpu.memory_space<vmem>>, %arg4: memref<128x3xf32, #tpu.memory_space<vmem>>, %arg5: memref<1x3xf32, #tpu.memory_space<vmem>>, %arg6: memref<8x3xf32, #tpu.memory_space<vmem>>) attributes {dimension_semantics = [#tpu.dimension_semantics<parallel>], iteration_bounds = array<i64: 1>, scalar_prefetch = 0 : i64, scratch_operands = 0 : i64, tpu.core_type = #tpu.core_type<tc>, window_params = [{transform_indices = @transform_0, window_bounds = array<i64: 8, 5>}, {pipeline_mode = #tpu.pipeline_mode<synchronous>, transform_indices = @transform_1, window_bounds = array<i64: 5, 128>}, {pipeline_mode = #tpu.pipeline_mode<synchronous>, transform_indices = @transform_2, window_bounds = array<i64: 1, 128>}, {pipeline_mode = #tpu.pipeline_mode<synchronous>, transform_indices = @transform_3, window_bounds = array<i64: 128, 3>}, {pipeline_mode = #tpu.pipeline_mode<synchronous>, transform_indices = @transform_4, window_bounds = array<i64: 1, 3>}, {transform_indices = @transform_5, window_bounds = array<i64: 8, 3>}]} {
    %c0 = arith.constant 0 : index
    %c0_0 = arith.constant 0 : index
    %0 = vector.load %arg1[%c0, %c0_0] : memref<8x5xf32, #tpu.memory_space<vmem>>, vector<8x5xf32>
    %c0_1 = arith.constant 0 : index
    %c0_2 = arith.constant 0 : index
    %1 = vector.load %arg2[%c0_1, %c0_2] : memref<5x128xf32, #tpu.memory_space<vmem>>, vector<5x128xf32>
    %cst = arith.constant dense<0.000000e+00> : vector<8x128xf32>
    %2 = tpu.matmul %0, %1, %cst {dimension_numbers = #tpu.dot_dimension_numbers<[1], [0], [0], [1], [0, 0, 1, 1], [], []>} : vector<8x5xf32>, vector<5x128xf32>, vector<8x128xf32> -> vector<8x128xf32>
    %c0_3 = arith.constant 0 : index
    %c0_4 = arith.constant 0 : index
    %3 = vector.load %arg3[%c0_3, %c0_4] : memref<1x128xf32, #tpu.memory_space<vmem>>, vector<1x128xf32>
    %4 = vector.broadcast %3 : vector<1x128xf32> to vector<8x128xf32>
    %5 = arith.addf %2, %4 : vector<8x128xf32>
    %cst_5 = arith.constant 0.000000e+00 : f32
    %6 = vector.broadcast %cst_5 : f32 to vector<8x128xf32>
    %7 = arith.maximumf %5, %6 : vector<8x128xf32>
    %c0_6 = arith.constant 0 : index
    %c0_7 = arith.constant 0 : index
    %8 = vector.load %arg4[%c0_6, %c0_7] : memref<128x3xf32, #tpu.memory_space<vmem>>, vector<128x3xf32>
    %cst_8 = arith.constant dense<0.000000e+00> : vector<8x3xf32>
    %9 = tpu.matmul %7, %8, %cst_8 {dimension_numbers = #tpu.dot_dimension_numbers<[1], [0], [0], [1], [0, 0, 1, 1], [], []>} : vector<8x128xf32>, vector<128x3xf32>, vector<8x3xf32> -> vector<8x3xf32>
    %c0_9 = arith.constant 0 : index
    %c0_10 = arith.constant 0 : index
    %10 = vector.load %arg5[%c0_9, %c0_10] : memref<1x3xf32, #tpu.memory_space<vmem>>, vector<1x3xf32>
    %11 = vector.broadcast %10 : vector<1x3xf32> to vector<8x3xf32>
    %12 = arith.addf %9, %11 : vector<8x3xf32>
    %c0_11 = arith.constant 0 : index
    %c0_12 = arith.constant 0 : index
    %13 = vector.load %arg6[%c0_11, %c0_12] : memref<8x3xf32, #tpu.memory_space<vmem>>, vector<8x3xf32>
    tpu.vector_store %arg6[%c0_11, %c0_12], %12 {strides = array<i32>} : memref<8x3xf32, #tpu.memory_space<vmem>>, vector<8x3xf32>,
    return
  }
  func.func @transform_0(%arg0: i32) -> (i32, i32) {
    %c0_i32 = arith.constant 0 : i32
    %c0_i32_0 = arith.constant 0 : i32
    return %arg0, %c0_i32 : i32, i32
  }
  func.func @transform_1(%arg0: i32) -> (i32, i32) {
    %c0_i32 = arith.constant 0 : i32
    %c0_i32_0 = arith.constant 0 : i32
    %c0_i32_1 = arith.constant 0 : i32
    return %c0_i32, %c0_i32_0 : i32, i32
  }
  func.func @transform_2(%arg0: i32) -> (i32, i32) {
    %c0_i32 = arith.constant 0 : i32
    %c0_i32_0 = arith.constant 0 : i32
    %c0_i32_1 = arith.constant 0 : i32
    return %c0_i32, %c0_i32_0 : i32, i32
  }
  func.func @transform_3(%arg0: i32) -> (i32, i32) {
    %c0_i32 = arith.constant 0 : i32
    %c0_i32_0 = arith.constant 0 : i32
    %c0_i32_1 = arith.constant 0 : i32
    return %c0_i32, %c0_i32_0 : i32, i32
  }
  func.func @transform_4(%arg0: i32) -> (i32, i32) {
    %c0_i32 = arith.constant 0 : i32
    %c0_i32_0 = arith.constant 0 : i32
    %c0_i32_1 = arith.constant 0 : i32
    return %c0_i32, %c0_i32_0 : i32, i32
  }
  func.func @transform_5(%arg0: i32) -> (i32, i32) {
    %c0_i32 = arith.constant 0 : i32
    %c0_i32_0 = arith.constant 0 : i32
    return %arg0, %c0_i32 : i32, i32
  }
}

</mosaic_0001>

<llo_original>
// kernel: simple_net_forward.1
$region0: #{simple_net_forward.1}
  #allocation0 [shape = 'u32[]', space=smem, size = 0x4, offset = 0x4, fixed_abs, tag = 'smem constant byte address 0x4 - core index']
  #allocation1 [shape = 'u32[144,128]{1,0:T(1,128)}', space=vmem, size = 0x12000, scoped, tag = 'internal scratch']
  %s0 = inlined_call_operand.vmem [shape: f32[8,5], index: 0, kind: input, shape index: {}]
  %s1 = inlined_call_operand.vmem [shape: f32[5,128], index: 1, kind: input, shape index: {}]
  %s2 = inlined_call_operand.vmem [shape: f32[1,128], index: 2, kind: input, shape index: {}]
  %s3 = inlined_call_operand.vmem [shape: f32[128,3], index: 3, kind: input, shape index: {}]
  %s4 = inlined_call_operand.vmem [shape: f32[1,3], index: 4, kind: input, shape index: {}]
  %s5 = inlined_call_operand.vmem [shape: f32[8,3], index: 5, kind: output, shape index: {}]
  %s6 = sld [smem:[#allocation0]]
  $region30: #{simple_net_forward.1} parent=0
    _
  %s8 = ssub.s32 1, %s6
  %s9 = scalar_select 0, %s8, %s6
  // Predicated region
  $region2: #{simple_net_forward.1} parent=0 // pred_check
    _
  $region3: #{simple_net_forward.1} parent=0 // pred_check_branch
    %11 = sbr.rel (0) target = $region5
  $region4: #{simple_net_forward.1} parent=0 // pred_region
    _
  $region5: #{simple_net_forward.1} parent=0 // pred_fallthru
    _
  // Predicated region
  $region6: #{simple_net_forward.1} parent=0 // pred_check
    _
  $region7: #{simple_net_forward.1} parent=0 // pred_check_branch
    %13 = sbr.rel (0) target = $region9
  $region8: #{simple_net_forward.1} parent=0 // pred_region
    _
  $region9: #{simple_net_forward.1} parent=0 // pred_fallthru
    _
  // Predicated region
  $region10: #{simple_net_forward.1} parent=0 // pred_check
    _
  $region11: #{simple_net_forward.1} parent=0 // pred_check_branch
    %15 = sbr.rel (0) target = $region13
  $region12: #{simple_net_forward.1} parent=0 // pred_region
    _
  $region13: #{simple_net_forward.1} parent=0 // pred_fallthru
    _
  // Predicated region
  $region14: #{simple_net_forward.1} parent=0 // pred_check
    _
  $region15: #{simple_net_forward.1} parent=0 // pred_check_branch
    %17 = sbr.rel (0) target = $region17
  $region16: #{simple_net_forward.1} parent=0 // pred_region
    _
  $region17: #{simple_net_forward.1} parent=0 // pred_fallthru
    _
  // Predicated region
  $region18: #{simple_net_forward.1} parent=0 // pred_check
    _
  $region19: #{simple_net_forward.1} parent=0 // pred_check_branch
    %19 = sbr.rel (0) target = $region21
  $region20: #{simple_net_forward.1} parent=0 // pred_region
    _
  $region21: #{simple_net_forward.1} parent=0 // pred_fallthru
    _
  %v20 = vld [vmem:[%s0] sm:$0xff]
  %v21 = vld [vmem:[%s1] sm:$0x1f]
  %v22 = vld [vmem:[%s2] sm:$0x1]
  %v24 = vlaneseq
  %v25 = vshrl.u32 %v24, 7
  %v26 = vsub.s32 0, %v25
  %v27 = vrot.slane %v22, %v26
  %vm29 = vcmask 39936
  %v31 = vsel %vm29, %v20, 0
  %vm33 = vcmask 1044480
  %v35 = vsel %vm33, %v21, 0
  %37 = vmatprep.subr.mxu0 0.0
  %38 = vmatpush1.msra.mxu0 0.0
  %39 = vmatprep.subr.mxu0 0.0
  %40 = vmatpush1.msra.mxu0 0.0
  %41 = vmatprep.subr.mxu0 0.0
  %42 = vmatpush1.msra.mxu0 0.0
  %43 = vmatprep.subr.mxu0 0.0
  %44 = vmatpush1.msra.mxu0 0.0
  %45 = vmatprep.subr.mxu0 0.0
  %46 = vmatpush1.msra.mxu0 0.0
  %47 = vmatprep.subr.mxu0 0.0
  %48 = vmatpush1.msra.mxu0 0.0
  %49 = vmatprep.subr.mxu0 0.0
  %50 = vmatpush1.msra.mxu0 0.0
  %51 = vmatprep.subr.mxu0 0.0
  %52 = vmatpush1.msra.mxu0 0.0
  %53 = vmatprep.subr.mxu0 0.0
  %54 = vmatpush1.msra.mxu0 0.0
  %55 = vmatprep.subr.mxu0 0.0
  %56 = vmatpush1.msra.mxu0 0.0
  %57 = vmatprep.subr.mxu0 0.0
  %58 = vmatpush1.msra.mxu0 0.0
  %59 = vmatprep.subr.mxu0 0.0
  %60 = vmatpush1.msra.mxu0 0.0
  %61 = vmatprep.subr.mxu0 0.0
  %62 = vmatpush1.msra.mxu0 0.0
  %63 = vmatprep.subr.mxu0 0.0
  %64 = vmatpush1.msra.mxu0 0.0
  %65 = vmatprep.subr.mxu0 0.0
  %66 = vmatpush1.msra.mxu0 0.0
  %67 = vmatprep.subr.mxu0 0.0
  %68 = vmatpush1.msra.mxu0 %v35
  %69 = vmatprep.subr.mxu0 0.0
  %70 = vmatpush2.msra.mxu0 0.0
  %71 = vmatprep.subr.mxu0 0.0
  %72 = vmatpush2.msra.mxu0 0.0
  %73 = vmatprep.subr.mxu0 0.0
  %74 = vmatpush2.msra.mxu0 0.0
  %75 = vmatprep.subr.mxu0 0.0
  %76 = vmatpush2.msra.mxu0 0.0
  %77 = vmatprep.subr.mxu0 0.0
  %78 = vmatpush2.msra.mxu0 0.0
  %79 = vmatprep.subr.mxu0 0.0
  %80 = vmatpush2.msra.mxu0 0.0
  %81 = vmatprep.subr.mxu0 0.0
  %82 = vmatpush2.msra.mxu0 0.0
  %83 = vmatprep.subr.mxu0 0.0
  %84 = vmatpush2.msra.mxu0 0.0
  %85 = vmatprep.subr.mxu0 0.0
  %86 = vmatpush2.msra.mxu0 0.0
  %87 = vmatprep.subr.mxu0 0.0
  %88 = vmatpush2.msra.mxu0 0.0
  %89 = vmatprep.subr.mxu0 0.0
  %90 = vmatpush2.msra.mxu0 0.0
  %91 = vmatprep.subr.mxu0 0.0
  %92 = vmatpush2.msra.mxu0 0.0
  %93 = vmatprep.subr.mxu0 0.0
  %94 = vmatpush2.msra.mxu0 0.0
  %95 = vmatprep.subr.mxu0 0.0
  %96 = vmatpush2.msra.mxu0 0.0
  %97 = vmatprep.subr.mxu0 0.0
  %98 = vmatpush2.msra.mxu0 0.0
  %99 = vmatprep.subr.mxu0 0.0
  %100 = vmatpush2.msra.mxu0 0.0
  %101 = vmatprep.mubr.f32.mxu0 0.0
  %102 = vmatmul.mubr.f32.gmra.mxu0 %v31
  %v103 = vpop.f32.mrf.mxu0
  %v104 = vadd.f32 %v27, %v103
  %v105 = vpop.f32.mrf.mxu0
  %106 = vdwg.mxu0
  %v107 = vmax.f32 %v104, 0.0
  %v108 = vld [vmem:[%s3] sm:$0xff]
  %v109 = vld [vmem:[%s3 + $0x8] sm:$0xff]
  %v110 = vld [vmem:[%s3 + $0x10] sm:$0xff]
  %v111 = vld [vmem:[%s3 + $0x18] sm:$0xff]
  %v112 = vld [vmem:[%s3 + $0x20] sm:$0xff]
  %v113 = vld [vmem:[%s3 + $0x28] sm:$0xff]
  %v114 = vld [vmem:[%s3 + $0x30] sm:$0xff]
  %v115 = vld [vmem:[%s3 + $0x38] sm:$0xff]
  %v116 = vld [vmem:[%s3 + $0x40] sm:$0xff]
  %v117 = vld [vmem:[%s3 + $0x48] sm:$0xff]
  %v118 = vld [vmem:[%s3 + $0x50] sm:$0xff]
  %v119 = vld [vmem:[%s3 + $0x58] sm:$0xff]
  %v120 = vld [vmem:[%s3 + $0x60] sm:$0xff]
  %v121 = vld [vmem:[%s3 + $0x68] sm:$0xff]
  %v122 = vld [vmem:[%s3 + $0x70] sm:$0xff]
  %v123 = vld [vmem:[%s3 + $0x78] sm:$0xff]
  %v124 = vld [vmem:[%s4] sm:$0x1]
  %v126 = vlaneseq
  %v127 = vshrl.u32 %v126, 7
  %v128 = vsub.s32 0, %v127
  %v129 = vrot.slane %v124, %v128
  %131 = vmatprep.subr.mxu0 0.0
  %132 = vmatpush1.msra.mxu0 %v123
  %133 = vmatprep.subr.mxu0 0.0
  %134 = vmatpush1.msra.mxu0 %v122
  %135 = vmatprep.subr.mxu0 0.0
  %136 = vmatpush1.msra.mxu0 %v121
  %137 = vmatprep.subr.mxu0 0.0
  %138 = vmatpush1.msra.mxu0 %v120
  %139 = vmatprep.subr.mxu0 0.0
  %140 = vmatpush1.msra.mxu0 %v119
  %141 = vmatprep.subr.mxu0 0.0
  %142 = vmatpush1.msra.mxu0 %v118
  %143 = vmatprep.subr.mxu0 0.0
  %144 = vmatpush1.msra.mxu0 %v117
  %145 = vmatprep.subr.mxu0 0.0
  %146 = vmatpush1.msra.mxu0 %v116
  %147 = vmatprep.subr.mxu0 0.0
  %148 = vmatpush1.msra.mxu0 %v115
  %149 = vmatprep.subr.mxu0 0.0
  %150 = vmatpush1.msra.mxu0 %v114
  %151 = vmatprep.subr.mxu0 0.0
  %152 = vmatpush1.msra.mxu0 %v113
  %153 = vmatprep.subr.mxu0 0.0
  %154 = vmatpush1.msra.mxu0 %v112
  %155 = vmatprep.subr.mxu0 0.0
  %156 = vmatpush1.msra.mxu0 %v111
  %157 = vmatprep.subr.mxu0 0.0
  %158 = vmatpush1.msra.mxu0 %v110
  %159 = vmatprep.subr.mxu0 0.0
  %160 = vmatpush1.msra.mxu0 %v109
  %161 = vmatprep.subr.mxu0 0.0
  %162 = vmatpush1.msra.mxu0 %v108
  %163 = vmatprep.subr.mxu0 0.0
  %164 = vmatpush2.msra.mxu0 0.0
  %165 = vmatprep.subr.mxu0 0.0
  %166 = vmatpush2.msra.mxu0 0.0
  %167 = vmatprep.subr.mxu0 0.0
  %168 = vmatpush2.msra.mxu0 0.0
  %169 = vmatprep.subr.mxu0 0.0
  %170 = vmatpush2.msra.mxu0 0.0
  %171 = vmatprep.subr.mxu0 0.0
  %172 = vmatpush2.msra.mxu0 0.0
  %173 = vmatprep.subr.mxu0 0.0
  %174 = vmatpush2.msra.mxu0 0.0
  %175 = vmatprep.subr.mxu0 0.0
  %176 = vmatpush2.msra.mxu0 0.0
  %177 = vmatprep.subr.mxu0 0.0
  %178 = vmatpush2.msra.mxu0 0.0
  %179 = vmatprep.subr.mxu0 0.0
  %180 = vmatpush2.msra.mxu0 0.0
  %181 = vmatprep.subr.mxu0 0.0
  %182 = vmatpush2.msra.mxu0 0.0
  %183 = vmatprep.subr.mxu0 0.0
  %184 = vmatpush2.msra.mxu0 0.0
  %185 = vmatprep.subr.mxu0 0.0
  %186 = vmatpush2.msra.mxu0 0.0
  %187 = vmatprep.subr.mxu0 0.0
  %188 = vmatpush2.msra.mxu0 0.0
  %189 = vmatprep.subr.mxu0 0.0
  %190 = vmatpush2.msra.mxu0 0.0
  %191 = vmatprep.subr.mxu0 0.0
  %192 = vmatpush2.msra.mxu0 0.0
  %193 = vmatprep.subr.mxu0 0.0
  %194 = vmatpush2.msra.mxu0 0.0
  %195 = vmatprep.mubr.f32.mxu0 0.0
  %196 = vmatmul.mubr.f32.gmra.mxu0 %v107
  %v197 = vpop.f32.mrf.mxu0
  %v198 = vadd.f32 %v129, %v197
  %v199 = vpop.f32.mrf.mxu0
  %200 = vdwg.mxu0
  %vm201 = vcmask 23552
  %202 = vst.msk [vmem:[%s5] sm:$0xff] %vm201, %v198
  // Predicated region
  $region22: #{simple_net_forward.1} parent=0 // pred_check
    _
  $region23: #{simple_net_forward.1} parent=0 // pred_check_branch
    %204 = sbr.rel (0) target = $region25
  $region24: #{simple_net_forward.1} parent=0 // pred_region
    _
  $region25: #{simple_net_forward.1} parent=0 // pred_fallthru
    _
  // Predicated region
  $region26: #{simple_net_forward.1} parent=0 // pred_check
    _
  $region27: #{simple_net_forward.1} parent=0 // pred_check_branch
    %206 = sbr.rel (0) target = $region29
  $region28: #{simple_net_forward.1} parent=0 // pred_region
    _
  $region29: #{simple_net_forward.1} parent=0 // pred_fallthru
    _

</llo_original>
